<compile_context>
chip_gen: v6e
topology: v6e:2x2x1
jax: 0.10.0
libtpu: 0.0.40
codegen_flags: <defaults>
</compile_context>

<pallas_src>
import jax
import jax.numpy as jnp
from jax.experimental import pallas as pl
from jax.experimental.pallas import tpu as pltpu


def _round_up(x, m):
    return ((x + m - 1) // m) * m


def _pick_hidden_tile(H, th_max):
    """Largest multiple of 128 that divides H and is <= th_max, else H."""
    if H <= th_max:
        return H
    start = (th_max // 128) * 128
    for th in range(start, 127, -128):
        if H % th == 0:
            return th
    return H  # fall back: keep hidden dim whole


def mlp_kernel(x_ref, w1_ref, b1_ref, w2_ref, b2_ref, o_ref, acc_ref):
    # x_ref:  (TM, Cin)  bf16     w1_ref: (Cin, TH) bf16    b1_ref: (1, TH)  f32
    # w2_ref: (TH, Cout) bf16     b2_ref: (1, Cout) f32
    # o_ref:  (TM, Cout)          acc_ref: (TM, Cout) f32 scratch (resident)
    hk = pl.program_id(1)

    @pl.when(hk == 0)
    def _():
        acc_ref[...] = jnp.zeros_like(acc_ref)

    # fc1 partial: bf16 x bf16 -> f32 on the MXU, bias add + ReLU6 in f32.
    h = jnp.dot(x_ref[...], w1_ref[...], preferred_element_type=jnp.float32)
    h = h + b1_ref[...]
    h = jnp.minimum(jnp.maximum(h, 0.0), 6.0)       # ReLU6
    # Dropout(p=0.0) is an identity -> no-op.

    # fc2 partial: accumulate over hidden-dim tiles.
    acc_ref[...] += jnp.dot(h.astype(w2_ref.dtype), w2_ref[...],
                            preferred_element_type=jnp.float32)

    @pl.when(hk == pl.num_programs(1) - 1)
    def _():
        o_ref[...] = (acc_ref[...] + b2_ref[...]).astype(o_ref.dtype)


def prepare_mlp_params(w1, b1, w2, b2, compute_dtype=jnp.bfloat16):
    """One-time conversion of PyTorch nn.Linear params to kernel layout.

    w1: (H, Cin), b1: (H,), w2: (Cout, H), b2: (Cout,)
    Returns (w1_t (Cin,H) bf16, b1 (1,H) f32, w2_t (H,Cout) bf16, b2 (1,Cout) f32).
    """
    return (jnp.asarray(w1.T, compute_dtype),
            jnp.asarray(b1, jnp.float32).reshape(1, -1),
            jnp.asarray(w2.T, compute_dtype),
            jnp.asarray(b2, jnp.float32).reshape(1, -1))


def mlp_pallas(x, w1_t, b1_2d, w2_t, b2_2d, *, tm=256, th_max=512,
               out_dtype=None):
    """x: [B, N, Cin]; params from prepare_mlp_params. Returns [B, N, Cout]."""
    B, N, Cin = x.shape
    H = w1_t.shape[1]
    Cout = w2_t.shape[1]
    out_dtype = out_dtype or x.dtype
    compute_dtype = w1_t.dtype

    rows = B * N
    # Row tile: large enough to feed the MXU, aligned to 32 sublanes (covers
    # bf16 packing); rows are zero-padded so any token count works.
    tm = min(tm, _round_up(rows, 32))
    rows_pad = _round_up(rows, tm)

    x2d = x.reshape(rows, Cin).astype(compute_dtype)
    if rows_pad != rows:
        x2d = jnp.pad(x2d, ((0, rows_pad - rows), (0, 0)))

    th = _pick_hidden_tile(H, th_max)
    grid = (rows_pad // tm, H // th)

    out = pl.pallas_call(
        mlp_kernel,
        out_shape=jax.ShapeDtypeStruct((rows_pad, Cout), out_dtype),
        grid_spec=pltpu.PrefetchScalarGridSpec(
            num_scalar_prefetch=0,
            grid=grid,
            in_specs=[
                pl.BlockSpec((tm, Cin), lambda i, h: (i, 0)),    # x row tile
                pl.BlockSpec((Cin, th), lambda i, h: (0, h)),    # w1^T slab
                pl.BlockSpec((1, th), lambda i, h: (0, h)),      # b1 slab
                pl.BlockSpec((th, Cout), lambda i, h: (h, 0)),   # w2^T slab
                pl.BlockSpec((1, Cout), lambda i, h: (0, 0)),    # b2
            ],
            out_specs=pl.BlockSpec((tm, Cout), lambda i, h: (i, 0)),
            scratch_shapes=[pltpu.VMEM((tm, Cout), jnp.float32)],
        ),
        compiler_params=pltpu.CompilerParams(
            dimension_semantics=("parallel", "arbitrary")),
    )(x2d, w1_t, b1_2d, w2_t, b2_2d)

    if rows_pad != rows:
        out = out[:rows]
    return out.reshape(B, N, Cout)


def mlp_reference(x, w1_t, b1_2d, w2_t, b2_2d):
    """Pure-JAX reference mirroring the kernel's bf16 operand precision."""
    cd = w1_t.dtype
    xf = x.astype(cd).astype(jnp.float32)
    h = jnp.einsum("bnc,ch->bnh", xf, w1_t.astype(jnp.float32)) + b1_2d[0]
    h = jnp.clip(h, 0.0, 6.0).astype(cd).astype(jnp.float32)
    o = jnp.einsum("bnh,ho->bno", h, w2_t.astype(jnp.float32)) + b2_2d[0]
    return o


def torch_linear_init(key, out_f, in_f):
    """Deterministic init mimicking PyTorch nn.Linear default (uniform ±1/sqrt(fan_in))."""
    kw, kb = jax.random.split(key)
    bound = 1.0 / (in_f ** 0.5)
    w = jax.random.uniform(kw, (out_f, in_f), jnp.float32, -bound, bound)
    b = jax.random.uniform(kb, (out_f,), jnp.float32, -bound, bound)
    return w, b


if __name__ == "__main__":
    key = jax.random.PRNGKey(0)

    # Two small configs:
    #  1) token count not a multiple of the tile  -> exercises row padding
    #  2) th_max=128 with H=256                   -> exercises the hidden-dim
    #     reduction axis (two h-tiles + accumulator init/finalize)
    configs = [
        # (B, N, Cin, H, th_max)
        (2, 9, 32, 64, 512),
        (2, 8, 128, 256, 128),
    ]

    for idx, (B, N, Cin, H, th_max) in enumerate(configs):
        Cout = Cin
        key, kx, k1, k2 = jax.random.split(key, 4)
        x = jax.random.normal(kx, (B, N, Cin), jnp.float32)
        w1, b1 = torch_linear_init(k1, H, Cin)      # fc1: in -> hidden
        w2, b2 = torch_linear_init(k2, Cout, H)     # fc2: hidden -> out

        params = prepare_mlp_params(w1, b1, w2, b2)  # one-time param prep
        out = mlp_pallas(x, *params, tm=256, th_max=th_max)
        out = jax.block_until_ready(out)

        ref = mlp_reference(x, *params)
        assert out.shape == (B, N, Cout)
        max_err = float(jnp.max(jnp.abs(out - ref)))
        assert jnp.allclose(out, ref, atol=2e-2, rtol=2e-2), (
            f"config {idx}: mismatch vs reference (max err {max_err})")

    print("KERNEL_OK")
</pallas_src>

<mosaic_0001>
module attributes {stable_mosaic.version = 11 : i64} {
  func.func @mlp_kernel(%arg0: i32, %arg1: i32, %arg2: memref<32x32xbf16, #tpu.memory_space<vmem>>, %arg3: memref<32x64xbf16, #tpu.memory_space<vmem>>, %arg4: memref<1x64xf32, #tpu.memory_space<vmem>>, %arg5: memref<64x32xbf16, #tpu.memory_space<vmem>>, %arg6: memref<1x32xf32, #tpu.memory_space<vmem>>, %arg7: memref<32x32xf32, #tpu.memory_space<vmem>>, %arg8: memref<32x32xf32, #tpu.memory_space<vmem>>) attributes {dimension_semantics = [#tpu.dimension_semantics<parallel>, #tpu.dimension_semantics<arbitrary>], iteration_bounds = array<i64: 1, 1>, scalar_prefetch = 0 : i64, scratch_operands = 1 : i64, tpu.core_type = #tpu.core_type<tc>, window_params = [{transform_indices = @transform_0, window_bounds = array<i64: 32, 32>}, {transform_indices = @transform_1, window_bounds = array<i64: 32, 64>}, {transform_indices = @transform_2, window_bounds = array<i64: 1, 64>}, {transform_indices = @transform_3, window_bounds = array<i64: 64, 32>}, {pipeline_mode = #tpu.pipeline_mode<synchronous>, transform_indices = @transform_4, window_bounds = array<i64: 1, 32>}, {transform_indices = @transform_5, window_bounds = array<i64: 32, 32>}]} {
    %c0_i32 = arith.constant 0 : i32
    %0 = arith.cmpi eq, %arg1, %c0_i32 : i32
    %1 = arith.extui %0 : i1 to i32
    %c0_i32_0 = arith.constant 0 : i32
    %2 = arith.cmpi ne, %1, %c0_i32_0 : i32
    scf.if %2 {
      %cst_17 = arith.constant 0.000000e+00 : f32
      %22 = vector.broadcast %cst_17 : f32 to vector<32x32xf32>
      %c0_18 = arith.constant 0 : index
      %c0_19 = arith.constant 0 : index
      %23 = vector.load %arg8[%c0_18, %c0_19] : memref<32x32xf32, #tpu.memory_space<vmem>>, vector<32x32xf32>
      tpu.vector_store %arg8[%c0_18, %c0_19], %22 {strides = array<i32>} : memref<32x32xf32, #tpu.memory_space<vmem>>, vector<32x32xf32>,
    } else {
    }
    %c0 = arith.constant 0 : index
    %c0_1 = arith.constant 0 : index
    %3 = vector.load %arg2[%c0, %c0_1] : memref<32x32xbf16, #tpu.memory_space<vmem>>, vector<32x32xbf16>
    %c0_2 = arith.constant 0 : index
    %c0_3 = arith.constant 0 : index
    %4 = vector.load %arg3[%c0_2, %c0_3] : memref<32x64xbf16, #tpu.memory_space<vmem>>, vector<32x64xbf16>
    %cst = arith.constant dense<0.000000e+00> : vector<32x64xf32>
    %5 = tpu.matmul %3, %4, %cst {dimension_numbers = #tpu.dot_dimension_numbers<[1], [0], [0], [1], [0, 0, 1, 1], [], []>} : vector<32x32xbf16>, vector<32x64xbf16>, vector<32x64xf32> -> vector<32x64xf32>
    %c0_4 = arith.constant 0 : index
    %c0_5 = arith.constant 0 : index
    %6 = vector.load %arg4[%c0_4, %c0_5] : memref<1x64xf32, #tpu.memory_space<vmem>>, vector<1x64xf32>
    %7 = vector.broadcast %6 : vector<1x64xf32> to vector<32x64xf32>
    %8 = arith.addf %5, %7 : vector<32x64xf32>
    %cst_6 = arith.constant 0.000000e+00 : f32
    %9 = vector.broadcast %cst_6 : f32 to vector<32x64xf32>
    %10 = arith.maximumf %8, %9 : vector<32x64xf32>
    %cst_7 = arith.constant 6.000000e+00 : f32
    %11 = vector.broadcast %cst_7 : f32 to vector<32x64xf32>
    %12 = arith.minimumf %10, %11 : vector<32x64xf32>
    %c0_8 = arith.constant 0 : index
    %c0_9 = arith.constant 0 : index
    %13 = vector.load %arg8[%c0_8, %c0_9] : memref<32x32xf32, #tpu.memory_space<vmem>>, vector<32x32xf32>
    %14 = arith.truncf %12 : vector<32x64xf32> to vector<32x64xbf16>
    %c0_10 = arith.constant 0 : index
    %c0_11 = arith.constant 0 : index
    %15 = vector.load %arg5[%c0_10, %c0_11] : memref<64x32xbf16, #tpu.memory_space<vmem>>, vector<64x32xbf16>
    %cst_12 = arith.constant dense<0.000000e+00> : vector<32x32xf32>
    %16 = tpu.matmul %14, %15, %cst_12 {dimension_numbers = #tpu.dot_dimension_numbers<[1], [0], [0], [1], [0, 0, 1, 1], [], []>} : vector<32x64xbf16>, vector<64x32xbf16>, vector<32x32xf32> -> vector<32x32xf32>
    %17 = arith.addf %13, %16 : vector<32x32xf32>
    %c0_13 = arith.constant 0 : index
    %c0_14 = arith.constant 0 : index
    %18 = vector.load %arg8[%c0_13, %c0_14] : memref<32x32xf32, #tpu.memory_space<vmem>>, vector<32x32xf32>
    tpu.vector_store %arg8[%c0_13, %c0_14], %17 {strides = array<i32>} : memref<32x32xf32, #tpu.memory_space<vmem>>, vector<32x32xf32>,
    %c0_i32_15 = arith.constant 0 : i32
    %19 = arith.cmpi eq, %arg1, %c0_i32_15 : i32
    %20 = arith.extui %19 : i1 to i32
    %c0_i32_16 = arith.constant 0 : i32
    %21 = arith.cmpi ne, %20, %c0_i32_16 : i32
    scf.if %21 {
      %c0_17 = arith.constant 0 : index
      %c0_18 = arith.constant 0 : index
      %22 = vector.load %arg8[%c0_17, %c0_18] : memref<32x32xf32, #tpu.memory_space<vmem>>, vector<32x32xf32>
      %c0_19 = arith.constant 0 : index
      %c0_20 = arith.constant 0 : index
      %23 = vector.load %arg6[%c0_19, %c0_20] : memref<1x32xf32, #tpu.memory_space<vmem>>, vector<1x32xf32>
      %24 = vector.broadcast %23 : vector<1x32xf32> to vector<32x32xf32>
      %25 = arith.addf %22, %24 : vector<32x32xf32>
      %c0_21 = arith.constant 0 : index
      %c0_22 = arith.constant 0 : index
      %26 = vector.load %arg7[%c0_21, %c0_22] : memref<32x32xf32, #tpu.memory_space<vmem>>, vector<32x32xf32>
      tpu.vector_store %arg7[%c0_21, %c0_22], %25 {strides = array<i32>} : memref<32x32xf32, #tpu.memory_space<vmem>>, vector<32x32xf32>,
    } else {
    }
    return
  }
  func.func @transform_0(%arg0: i32, %arg1: i32) -> (i32, i32) {
    %c0_i32 = arith.constant 0 : i32
    %c0_i32_0 = arith.constant 0 : i32
    return %arg0, %c0_i32 : i32, i32
  }
  func.func @transform_1(%arg0: i32, %arg1: i32) -> (i32, i32) {
    %c0_i32 = arith.constant 0 : i32
    %c0_i32_0 = arith.constant 0 : i32
    return %c0_i32, %arg1 : i32, i32
  }
  func.func @transform_2(%arg0: i32, %arg1: i32) -> (i32, i32) {
    %c0_i32 = arith.constant 0 : i32
    %c0_i32_0 = arith.constant 0 : i32
    return %c0_i32, %arg1 : i32, i32
  }
  func.func @transform_3(%arg0: i32, %arg1: i32) -> (i32, i32) {
    %c0_i32 = arith.constant 0 : i32
    %c0_i32_0 = arith.constant 0 : i32
    return %arg1, %c0_i32 : i32, i32
  }
  func.func @transform_4(%arg0: i32, %arg1: i32) -> (i32, i32) {
    %c0_i32 = arith.constant 0 : i32
    %c0_i32_0 = arith.constant 0 : i32
    %c0_i32_1 = arith.constant 0 : i32
    return %c0_i32, %c0_i32_0 : i32, i32
  }
  func.func @transform_5(%arg0: i32, %arg1: i32) -> (i32, i32) {
    %c0_i32 = arith.constant 0 : i32
    %c0_i32_0 = arith.constant 0 : i32
    return %arg0, %c0_i32 : i32, i32
  }
}

</mosaic_0001>

<llo_original>
// kernel: tpu_custom_call.1
$region0: #{tpu_custom_call.1}
  #allocation0 [shape = 'u32[]', space=smem, size = 0x4, offset = 0x4, fixed_abs, tag = 'smem constant byte address 0x4 - core index']
  #allocation1 [shape = 'u32[144,128]{1,0:T(1,128)}', space=vmem, size = 0x12000, scoped, tag = 'internal scratch']
  #allocation2 [shape = 'f32[32,32]{1,0:T(8,128)}', space=vmem, size = 0x4000, scoped, tag = 'scratch operand']
  %s0 = inlined_call_operand.vmem [shape: bf16[32,32], index: 0, kind: input, shape index: {}]
  %s1 = inlined_call_operand.vmem [shape: bf16[32,64], index: 1, kind: input, shape index: {}]
  %s2 = inlined_call_operand.vmem [shape: f32[1,64], index: 2, kind: input, shape index: {}]
  %s3 = inlined_call_operand.vmem [shape: bf16[64,32], index: 3, kind: input, shape index: {}]
  %s4 = inlined_call_operand.vmem [shape: f32[1,32], index: 4, kind: input, shape index: {}]
  %s5 = inlined_call_operand.hbm [shape: f32[32,32], index: 5, kind: output, shape index: {}]
  %s6 = sld [smem:[#allocation0]]
  $region38: #{tpu_custom_call.1} parent=0
    _
  %s8 = ssub.s32 1, %s6
  %s9 = scalar_select 0, %s8, %s6
  $region1: #{tpu_custom_call.1} parent=0
    #allocation3 [shape = 'u8[16384]{0}', space=vmem, size = 0x4000, scoped, tag = 'output window, operand 0, single buffered']
    #allocation4 [shape = 's32[1]{0}', space=sflag, size = 0x4, scoped, tag = 'scoped memory for tpu_custom_call.1']
    %10 = vsyncpa [#allocation4], 0
    // Predicated region
    $region2: #{tpu_custom_call.1} parent=1 // pred_check
      _
    $region3: #{tpu_custom_call.1} parent=1 // pred_check_branch
      %12 = sbr.rel (0) target = $region5
    $region4: #{tpu_custom_call.1} parent=1 // pred_region
      _
    $region5: #{tpu_custom_call.1} parent=1 // pred_fallthru
      _
    // Predicated region
    $region6: #{tpu_custom_call.1} parent=1 // pred_check
      _
    $region7: #{tpu_custom_call.1} parent=1 // pred_check_branch
      %14 = sbr.rel (0) target = $region9
    $region8: #{tpu_custom_call.1} parent=1 // pred_region
      _
    $region9: #{tpu_custom_call.1} parent=1 // pred_fallthru
      _
    // Predicated region
    $region10: #{tpu_custom_call.1} parent=1 // pred_check
      _
    $region11: #{tpu_custom_call.1} parent=1 // pred_check_branch
      %16 = sbr.rel (0) target = $region13
    $region12: #{tpu_custom_call.1} parent=1 // pred_region
      _
    $region13: #{tpu_custom_call.1} parent=1 // pred_fallthru
      _
    // Predicated region
    $region14: #{tpu_custom_call.1} parent=1 // pred_check
      _
    $region15: #{tpu_custom_call.1} parent=1 // pred_check_branch
      %18 = sbr.rel (0) target = $region17
    $region16: #{tpu_custom_call.1} parent=1 // pred_region
      _
    $region17: #{tpu_custom_call.1} parent=1 // pred_fallthru
      _
    // Predicated region
    $region18: #{tpu_custom_call.1} parent=1 // pred_check
      _
    $region19: #{tpu_custom_call.1} parent=1 // pred_check_branch
      %20 = sbr.rel (0) target = $region21
    $region20: #{tpu_custom_call.1} parent=1 // pred_region
      _
    $region21: #{tpu_custom_call.1} parent=1 // pred_fallthru
      _
    %p22 = scmp.eq.s32.totalorder 0, 0
    // Predicated region
    $region22: #{tpu_custom_call.1} parent=1 // pred_check
      %p23 = pneg %p22
    $region23: #{tpu_custom_call.1} parent=1 // pred_check_branch
      %25 = sbr.rel (%p23) target = $region25
    $region24: #{tpu_custom_call.1} parent=1 // pred_region
      %vm26 = vcmask 261120
      %27 = vst.msk [vmem:[#allocation2] sm:$0xff] %vm26, 0.0
      %28 = vst.msk [vmem:[#allocation2 + $0x8] sm:$0xff] %vm26, 0.0
      %29 = vst.msk [vmem:[#allocation2 + $0x10] sm:$0xff] %vm26, 0.0
      %30 = vst.msk [vmem:[#allocation2 + $0x18] sm:$0xff] %vm26, 0.0
    $region25: #{tpu_custom_call.1} parent=1 // pred_fallthru
      _
    %v31 = vld [vmem:[%s0] sm:$0xf]
    %v32 = vld [vmem:[%s0 + $0x4] sm:$0xf]
    %v33 = vld [vmem:[%s0 + $0x8] sm:$0xf]
    %v34 = vld [vmem:[%s0 + $0xc] sm:$0xf]
    %v35 = vld [vmem:[%s1] sm:$0xf]
    %v36 = vld [vmem:[%s1 + $0x4] sm:$0xf]
    %v37 = vld [vmem:[%s1 + $0x8] sm:$0xf]
    %v38 = vld [vmem:[%s1 + $0xc] sm:$0xf]
    %v39 = vld [vmem:[%s2] sm:$0x1]
    %v41 = vlaneseq
    %v42 = vshrl.u32 %v41, 7
    %v43 = vsub.s32 0, %v42
    %v44 = vrot.slane %v39, %v43
    %v50 = vunpack.c.l.b16 %v31
    %v51 = vunpack.c.l.b16 %v32
    %v52 = vunpack.c.l.b16 %v33
    %v53 = vunpack.c.l.b16 %v34
    %v54 = vpack.c.b16 %v51, %v50
    %v55 = vpack.c.b16 %v53, %v52
    %v60 = vunpack.c.l.b16 %v35
    %v61 = vunpack.c.l.b16 %v36
    %v62 = vunpack.c.l.b16 %v37
    %v63 = vunpack.c.l.b16 %v38
    %v64 = vpack.c.b16 %v61, %v60
    %v65 = vpack.c.b16 %v63, %v62
    %vm68 = vcmask 261120
    %v70 = vsel %vm68, %v54, 0
    %v73 = vsel %vm68, %v55, 0
    %75 = vmatprep.subr.bf16.mxu0 0
    %76 = vmatpush1.bf16.msra.mxu0 0
    %77 = vmatprep.subr.bf16.mxu0 0
    %78 = vmatpush1.bf16.msra.mxu0 0
    %79 = vmatprep.subr.bf16.mxu0 0
    %80 = vmatpush1.bf16.msra.mxu0 0
    %81 = vmatprep.subr.bf16.mxu0 0
    %82 = vmatpush1.bf16.msra.mxu0 0
    %83 = vmatprep.subr.bf16.mxu0 0
    %84 = vmatpush1.bf16.msra.mxu0 0
    %85 = vmatprep.subr.bf16.mxu0 0
    %86 = vmatpush1.bf16.msra.mxu0 0
    %87 = vmatprep.subr.bf16.mxu0 0
    %88 = vmatpush1.bf16.msra.mxu0 %v65
    %89 = vmatprep.subr.bf16.mxu0 0
    %90 = vmatpush1.bf16.msra.mxu0 %v64
    %91 = vmatprep.subr.bf16.mxu0 0
    %92 = vmatpush2.bf16.msra.mxu0 0
    %93 = vmatprep.subr.bf16.mxu0 0
    %94 = vmatpush2.bf16.msra.mxu0 0
    %95 = vmatprep.subr.bf16.mxu0 0
    %96 = vmatpush2.bf16.msra.mxu0 0
    %97 = vmatprep.subr.bf16.mxu0 0
    %98 = vmatpush2.bf16.msra.mxu0 0
    %99 = vmatprep.subr.bf16.mxu0 0
    %100 = vmatpush2.bf16.msra.mxu0 0
    %101 = vmatprep.subr.bf16.mxu0 0
    %102 = vmatpush2.bf16.msra.mxu0 0
    %103 = vmatprep.subr.bf16.mxu0 0
    %104 = vmatpush2.bf16.msra.mxu0 0
    %105 = vmatprep.subr.bf16.mxu0 0
    %106 = vmatpush2.bf16.msra.mxu0 0
    %107 = vmatprep.mubr.bf16.mxu0 0
    %108 = vmatmul.mubr.bf16.gmra.mxu0 %v70
    %v109 = vpop.f32.mrf.mxu0
    %v110 = vadd.f32 %v44, %v109
    %v111 = vpop.f32.mrf.mxu0
    %v112 = vpop.f32.mrf.mxu0
    %v113 = vadd.f32 %v44, %v112
    %v114 = vpop.f32.mrf.mxu0
    %115 = vmatprep.mubr.bf16.mxu0 0
    %116 = vmatmul.mubr.bf16.gmra.mxu0 %v73
    %v117 = vpop.f32.mrf.mxu0
    %v118 = vadd.f32 %v44, %v117
    %v119 = vpop.f32.mrf.mxu0
    %v120 = vpop.f32.mrf.mxu0
    %v121 = vadd.f32 %v44, %v120
    %v122 = vpop.f32.mrf.mxu0
    %123 = vdwg.mxu0
    %v124 = vmax.f32 %v110, 0.0
    %v125 = vmax.f32 %v113, 0.0
    %v126 = vmax.f32 %v118, 0.0
    %v127 = vmax.f32 %v121, 0.0
    %v128 = vmin.f32 %v124, 6.0
    %v129 = vmin.f32 %v125, 6.0
    %v130 = vmin.f32 %v126, 6.0
    %v131 = vmin.f32 %v127, 6.0
    %v132 = vld [vmem:[#allocation2] sm:$0xff]
    %v133 = vld [vmem:[#allocation2 + $0x8] sm:$0xff]
    %v134 = vld [vmem:[#allocation2 + $0x10] sm:$0xff]
    %v135 = vld [vmem:[#allocation2 + $0x18] sm:$0xff]
    %v136 = vpack.c.bf16 %v129, %v128
    %v137 = vpack.c.bf16 %v131, %v130
    %v138 = vld [vmem:[%s3] sm:$0xf]
    %v139 = vld [vmem:[%s3 + $0x4] sm:$0xf]
    %v140 = vld [vmem:[%s3 + $0x8] sm:$0xf]
    %v141 = vld [vmem:[%s3 + $0xc] sm:$0xf]
    %v142 = vld [vmem:[%s3 + $0x10] sm:$0xf]
    %v143 = vld [vmem:[%s3 + $0x14] sm:$0xf]
    %v144 = vld [vmem:[%s3 + $0x18] sm:$0xf]
    %v145 = vld [vmem:[%s3 + $0x1c] sm:$0xf]
    %v154 = vunpack.c.l.b16 %v138
    %v155 = vunpack.c.l.b16 %v139
    %v156 = vunpack.c.l.b16 %v140
    %v157 = vunpack.c.l.b16 %v141
    %v158 = vunpack.c.l.b16 %v142
    %v159 = vunpack.c.l.b16 %v143
    %v160 = vunpack.c.l.b16 %v144
    %v161 = vunpack.c.l.b16 %v145
    %v162 = vpack.c.b16 %v155, %v154
    %v163 = vpack.c.b16 %v157, %v156
    %v164 = vpack.c.b16 %v159, %v158
    %v165 = vpack.c.b16 %v161, %v160
    %vm170 = vcmask 523264
    %v172 = vsel %vm170, %v136, 0
    %v175 = vsel %vm170, %v137, 0
    %177 = vmatprep.subr.bf16.mxu0 0
    %178 = vmatpush1.bf16.msra.mxu0 0
    %179 = vmatprep.subr.bf16.mxu0 0
    %180 = vmatpush1.bf16.msra.mxu0 0
    %181 = vmatprep.subr.bf16.mxu0 0
    %182 = vmatpush1.bf16.msra.mxu0 0
    %183 = vmatprep.subr.bf16.mxu0 0
    %184 = vmatpush1.bf16.msra.mxu0 0
    %185 = vmatprep.subr.bf16.mxu0 0
    %186 = vmatpush1.bf16.msra.mxu0 %v165
    %187 = vmatprep.subr.bf16.mxu0 0
    %188 = vmatpush1.bf16.msra.mxu0 %v164
    %189 = vmatprep.subr.bf16.mxu0 0
    %190 = vmatpush1.bf16.msra.mxu0 %v163
    %191 = vmatprep.subr.bf16.mxu0 0
    %192 = vmatpush1.bf16.msra.mxu0 %v162
    %193 = vmatprep.subr.bf16.mxu0 0
    %194 = vmatpush2.bf16.msra.mxu0 0
    %195 = vmatprep.subr.bf16.mxu0 0
    %196 = vmatpush2.bf16.msra.mxu0 0
    %197 = vmatprep.subr.bf16.mxu0 0
    %198 = vmatpush2.bf16.msra.mxu0 0
    %199 = vmatprep.subr.bf16.mxu0 0
    %200 = vmatpush2.bf16.msra.mxu0 0
    %201 = vmatprep.subr.bf16.mxu0 0
    %202 = vmatpush2.bf16.msra.mxu0 0
    %203 = vmatprep.subr.bf16.mxu0 0
    %204 = vmatpush2.bf16.msra.mxu0 0
    %205 = vmatprep.subr.bf16.mxu0 0
    %206 = vmatpush2.bf16.msra.mxu0 0
    %207 = vmatprep.subr.bf16.mxu0 0
    %208 = vmatpush2.bf16.msra.mxu0 0
    %209 = vmatprep.mubr.bf16.mxu0 0
    %210 = vmatmul.mubr.bf16.gmra.mxu0 %v172
    %v211 = vpop.f32.mrf.mxu0
    %v212 = vadd.f32 0.0, %v211
    %v213 = vpop.f32.mrf.mxu0
    %v214 = vpop.f32.mrf.mxu0
    %v215 = vadd.f32 0.0, %v214
    %v216 = vpop.f32.mrf.mxu0
    %217 = vmatprep.mubr.bf16.mxu0 0
    %218 = vmatmul.mubr.bf16.gmra.mxu0 %v175
    %v219 = vpop.f32.mrf.mxu0
    %v220 = vadd.f32 0.0, %v219
    %v221 = vpop.f32.mrf.mxu0
    %v222 = vpop.f32.mrf.mxu0
    %v223 = vadd.f32 0.0, %v222
    %v224 = vpop.f32.mrf.mxu0
    %225 = vdwg.mxu0
    %v226 = vadd.f32 %v132, %v212
    %v227 = vadd.f32 %v133, %v215
    %v228 = vadd.f32 %v134, %v220
    %v229 = vadd.f32 %v135, %v223
    %230 = vst.msk [vmem:[#allocation2] sm:$0xff] %vm68, %v226
    %231 = vst.msk [vmem:[#allocation2 + $0x8] sm:$0xff] %vm68, %v227
    %232 = vst.msk [vmem:[#allocation2 + $0x10] sm:$0xff] %vm68, %v228
    %233 = vst.msk [vmem:[#allocation2 + $0x18] sm:$0xff] %vm68, %v229
    // Predicated region
    $region26: #{tpu_custom_call.1} parent=1 // pred_check
      %p234 = pneg %p22
    $region27: #{tpu_custom_call.1} parent=1 // pred_check_branch
      %236 = sbr.rel (%p234) target = $region29
    $region28: #{tpu_custom_call.1} parent=1 // pred_region
      %v237 = vld [vmem:[#allocation2] sm:$0xff]
      %v238 = vld [vmem:[#allocation2 + $0x8] sm:$0xff]
      %v239 = vld [vmem:[#allocation2 + $0x10] sm:$0xff]
      %v240 = vld [vmem:[#allocation2 + $0x18] sm:$0xff]
      %v241 = vld [vmem:[%s4] sm:$0x1]
      %v243 = vlaneseq
      %v244 = vshrl.u32 %v243, 7
      %v245 = vsub.s32 0, %v244
      %v246 = vrot.slane %v241, %v245
      %v248 = vadd.f32 %v237, %v246
      %v249 = vadd.f32 %v238, %v246
      %v250 = vadd.f32 %v239, %v246
      %v251 = vadd.f32 %v240, %v246
      %252 = vst.msk [vmem:[#allocation3] sm:$0xff] %vm68, %v248
      %253 = vst.msk [vmem:[#allocation3 + $0x8] sm:$0xff] %vm68, %v249
      %254 = vst.msk [vmem:[#allocation3 + $0x10] sm:$0xff] %vm68, %v250
      %255 = vst.msk [vmem:[#allocation3 + $0x18] sm:$0xff] %vm68, %v251
    $region29: #{tpu_custom_call.1} parent=1 // pred_fallthru
      _
    // Predicated region
    $region30: #{tpu_custom_call.1} parent=1 // pred_check
      _
    $region31: #{tpu_custom_call.1} parent=1 // pred_check_branch
      %257 = sbr.rel (0) target = $region33
    $region32: #{tpu_custom_call.1} parent=1 // pred_region
      %s259 = ssub.s32 512, 512
      %260 = vsyncadd [#allocation4], %s259
      %s261 = sshll.u32 [#allocation3], 4
      %s262 = int_to_ptr.vmem [resolvable:$true] %s261
      %267 = dma.vmem_to_hbm [thread:$0]  %s262, 512, %s5, [#allocation4], 128, 128, 8
    $region33: #{tpu_custom_call.1} parent=1 // pred_fallthru
      _
    // Predicated region
    $region34: #{tpu_custom_call.1} parent=1 // pred_check
      _
    $region35: #{tpu_custom_call.1} parent=1 // pred_check_branch
      %269 = sbr.rel (0) target = $region37
    $region36: #{tpu_custom_call.1} parent=1 // pred_region
      %270 = dma.done [#allocation4], 512
    $region37: #{tpu_custom_call.1} parent=1 // pred_fallthru
      _
    %271 = vsyncpa [#allocation4], 1

</llo_original>
